<compile_context>
chip_gen: v7x
topology: tpu7x:2x2x1
jax: 0.10.0
libtpu: 0.0.40
codegen_flags: <defaults>
</compile_context>

<pallas_src>
import jax
import jax.numpy as jnp
from jax.experimental import pallas as pl
from jax.experimental.pallas import tpu as pltpu

HIDDEN = 64        # logical hidden width (matches nn.Linear(., 64))
HIDDEN_PAD = 128   # lane-dense hidden width
OUT_PAD = 128      # lane-dense output width


def _round_up(n, m):
    return ((n + m - 1) // m) * m


def policy_kernel(x_ref, w1_ref, b1_ref, w2_ref, b2_ref, w3_ref, b3_ref, o_ref):
    # Fused 3-layer MLP on one (TB, dim_in) batch tile.
    # MXU: bf16 operands, f32 accumulation.  VPU/EUP: f32 tanh / sigmoid.
    x = x_ref[...]                                                   # (TB, dim_in) bf16
    h1 = jnp.dot(x, w1_ref[...], preferred_element_type=jnp.float32) + b1_ref[...]
    h1 = jnp.tanh(h1)                                                # (TB, 128) f32
    h2 = jnp.dot(h1.astype(jnp.bfloat16), w2_ref[...],
                 preferred_element_type=jnp.float32) + b2_ref[...]
    h2 = jnp.tanh(h2)                                                # (TB, 128) f32
    logits = jnp.dot(h2.astype(jnp.bfloat16), w3_ref[...],
                     preferred_element_type=jnp.float32) + b3_ref[...]
    o_ref[...] = jax.nn.sigmoid(logits)                              # (TB, 128) f32, lane-dense


def prepare_params(params):
    """Zero-pad logical params to lane-dense shapes; weights -> bf16, biases -> (1,128) f32."""
    w1, b1 = params["w1"], params["b1"]
    w2, b2 = params["w2"], params["b2"]
    w3, b3 = params["w3"], params["b3"]
    dim_in = w1.shape[0]
    dim_out = w3.shape[1]
    bf = jnp.bfloat16
    w1p = jnp.zeros((dim_in, HIDDEN_PAD), bf).at[:, :HIDDEN].set(w1.astype(bf))
    w2p = jnp.zeros((HIDDEN_PAD, HIDDEN_PAD), bf).at[:HIDDEN, :HIDDEN].set(w2.astype(bf))
    w3p = jnp.zeros((HIDDEN_PAD, OUT_PAD), bf).at[:HIDDEN, :dim_out].set(w3.astype(bf))
    b1p = jnp.zeros((1, HIDDEN_PAD), jnp.float32).at[:, :HIDDEN].set(b1)
    b2p = jnp.zeros((1, HIDDEN_PAD), jnp.float32).at[:, :HIDDEN].set(b2)
    b3p = jnp.zeros((1, OUT_PAD), jnp.float32).at[:, :dim_out].set(b3)
    return {"w1": w1p, "b1": b1p, "w2": w2p, "b2": b2p, "w3": w3p, "b3": b3p}


def policy_forward(x, padded, dim_out, *, block_b=1024):
    """x: (B, dim_in) f32.  padded: output of prepare_params.  Returns (B, dim_out) f32."""
    B, dim_in = x.shape
    # Largest batch tile up to block_b; tile rows are a multiple of 8 (sublane).
    tb = min(block_b, _round_up(B, 8))
    b_pad = _round_up(B, tb)
    xb = x.astype(jnp.bfloat16)
    if b_pad != B:
        xb = jnp.pad(xb, ((0, b_pad - B), (0, 0)))
    grid = (b_pad // tb,)

    def resident(shape):
        # Full-array block, constant index -> stays in VMEM across all grid steps.
        return pl.BlockSpec(shape, lambda i: (0, 0))

    out = pl.pallas_call(
        policy_kernel,
        out_shape=jax.ShapeDtypeStruct((b_pad, OUT_PAD), jnp.float32),
        grid=grid,
        in_specs=[
            pl.BlockSpec((tb, dim_in), lambda i: (i, 0)),   # x: tiled over batch
            resident(padded["w1"].shape),
            resident(padded["b1"].shape),
            resident(padded["w2"].shape),
            resident(padded["b2"].shape),
            resident(padded["w3"].shape),
            resident(padded["b3"].shape),
        ],
        out_specs=pl.BlockSpec((tb, OUT_PAD), lambda i: (i, 0)),
        compiler_params=pltpu.CompilerParams(
            dimension_semantics=("parallel",),              # megacore / dual-TC batch split
        ),
    )(xb, padded["w1"], padded["b1"], padded["w2"], padded["b2"],
      padded["w3"], padded["b3"])
    return out[:B, :dim_out]


def init_params(key, dim_in, dim_out, hidden=HIDDEN):
    """Deterministic init matching nn.Linear's U(-1/sqrt(fan_in), 1/sqrt(fan_in)).
    Weights are stored as (in, out) = PyTorch weight.T."""
    ks = jax.random.split(key, 6)

    def linear(kw, kb, fan_in, fan_out):
        bound = 1.0 / jnp.sqrt(fan_in)
        w = jax.random.uniform(kw, (fan_in, fan_out), jnp.float32, -bound, bound)
        b = jax.random.uniform(kb, (1, fan_out), jnp.float32, -bound, bound)
        return w, b

    w1, b1 = linear(ks[0], ks[1], dim_in, hidden)
    w2, b2 = linear(ks[2], ks[3], hidden, hidden)
    w3, b3 = linear(ks[4], ks[5], hidden, dim_out)
    return {"w1": w1, "b1": b1, "w2": w2, "b2": b2, "w3": w3, "b3": b3}


def policy_ref_f32(x, params):
    """Pure-JAX f32 reference."""
    h1 = jnp.tanh(x @ params["w1"] + params["b1"])
    h2 = jnp.tanh(h1 @ params["w2"] + params["b2"])
    return jax.nn.sigmoid(h2 @ params["w3"] + params["b3"])


def policy_ref_bf16(x, params):
    """Pure-JAX reference with the same bf16-operand / f32-accum numerics as the kernel."""
    bf = jnp.bfloat16
    h1 = jnp.tanh(jnp.dot(x.astype(bf), params["w1"].astype(bf),
                          preferred_element_type=jnp.float32) + params["b1"])
    h2 = jnp.tanh(jnp.dot(h1.astype(bf), params["w2"].astype(bf),
                          preferred_element_type=jnp.float32) + params["b2"])
    return jax.nn.sigmoid(jnp.dot(h2.astype(bf), params["w3"].astype(bf),
                                  preferred_element_type=jnp.float32) + params["b3"])


if __name__ == "__main__":
    key = jax.random.PRNGKey(0)
    k_x, k_p, k_big = jax.random.split(key, 3)

    # CartPole-like sizes: observation dim 4, action dim 2.
    B, dim_in, dim_out = 8, 4, 2
    x = jax.random.normal(k_x, (B, dim_in), jnp.float32)
    params = init_params(k_p, dim_in, dim_out)
    padded = prepare_params(params)

    # Small-batch run (single grid step).
    out = jax.block_until_ready(policy_forward(x, padded, dim_out))
    assert out.shape == (B, dim_out)
    assert jnp.allclose(out, policy_ref_bf16(x, params), atol=1e-3, rtol=0), \
        "mismatch vs bf16-matched reference"
    assert jnp.allclose(out, policy_ref_f32(x, params), atol=5e-2, rtol=0), \
        "mismatch vs f32 reference"

    # Larger rollout batch exercising the gridded, dual-core-parallel path.
    Bb = 1024
    xb = jax.random.normal(k_big, (Bb, dim_in), jnp.float32)
    outb = jax.block_until_ready(policy_forward(xb, padded, dim_out, block_b=512))
    assert outb.shape == (Bb, dim_out)
    assert jnp.allclose(outb, policy_ref_bf16(xb, params), atol=1e-3, rtol=0), \
        "mismatch vs bf16-matched reference (batched)"
    assert jnp.allclose(outb, policy_ref_f32(xb, params), atol=5e-2, rtol=0), \
        "mismatch vs f32 reference (batched)"

    print("KERNEL_OK")
</pallas_src>

<mosaic_0001>
module attributes {stable_mosaic.version = 11 : i64} {
  func.func @policy_kernel(%arg0: i32, %arg1: memref<8x4xbf16, #tpu.memory_space<vmem>>, %arg2: memref<4x128xbf16, #tpu.memory_space<vmem>>, %arg3: memref<1x128xf32, #tpu.memory_space<vmem>>, %arg4: memref<128x128xbf16, #tpu.memory_space<vmem>>, %arg5: memref<1x128xf32, #tpu.memory_space<vmem>>, %arg6: memref<128x128xbf16, #tpu.memory_space<vmem>>, %arg7: memref<1x128xf32, #tpu.memory_space<vmem>>, %arg8: memref<8x128xf32, #tpu.memory_space<vmem>>) attributes {dimension_semantics = [#tpu.dimension_semantics<parallel>], iteration_bounds = array<i64: 1>, scalar_prefetch = 0 : i64, scratch_operands = 0 : i64, tpu.core_type = #tpu.core_type<tc>, window_params = [{transform_indices = @transform_0, window_bounds = array<i64: 8, 4>}, {pipeline_mode = #tpu.pipeline_mode<synchronous>, transform_indices = @transform_1, window_bounds = array<i64: 4, 128>}, {pipeline_mode = #tpu.pipeline_mode<synchronous>, transform_indices = @transform_2, window_bounds = array<i64: 1, 128>}, {pipeline_mode = #tpu.pipeline_mode<synchronous>, transform_indices = @transform_3, window_bounds = array<i64: 128, 128>}, {pipeline_mode = #tpu.pipeline_mode<synchronous>, transform_indices = @transform_4, window_bounds = array<i64: 1, 128>}, {pipeline_mode = #tpu.pipeline_mode<synchronous>, transform_indices = @transform_5, window_bounds = array<i64: 128, 128>}, {pipeline_mode = #tpu.pipeline_mode<synchronous>, transform_indices = @transform_6, window_bounds = array<i64: 1, 128>}, {transform_indices = @transform_7, window_bounds = array<i64: 8, 128>}]} {
    %c0 = arith.constant 0 : index
    %c0_0 = arith.constant 0 : index
    %0 = vector.load %arg1[%c0, %c0_0] : memref<8x4xbf16, #tpu.memory_space<vmem>>, vector<8x4xbf16>
    %c0_1 = arith.constant 0 : index
    %c0_2 = arith.constant 0 : index
    %1 = vector.load %arg2[%c0_1, %c0_2] : memref<4x128xbf16, #tpu.memory_space<vmem>>, vector<4x128xbf16>
    %cst = arith.constant dense<0.000000e+00> : vector<8x128xf32>
    %2 = tpu.matmul %0, %1, %cst {dimension_numbers = #tpu.dot_dimension_numbers<[1], [0], [0], [1], [0, 0, 1, 1], [], []>} : vector<8x4xbf16>, vector<4x128xbf16>, vector<8x128xf32> -> vector<8x128xf32>
    %c0_3 = arith.constant 0 : index
    %c0_4 = arith.constant 0 : index
    %3 = vector.load %arg3[%c0_3, %c0_4] : memref<1x128xf32, #tpu.memory_space<vmem>>, vector<1x128xf32>
    %4 = vector.broadcast %3 : vector<1x128xf32> to vector<8x128xf32>
    %5 = arith.addf %2, %4 : vector<8x128xf32>
    %6 = math.tanh %5 : vector<8x128xf32>
    %7 = arith.truncf %6 : vector<8x128xf32> to vector<8x128xbf16>
    %c0_5 = arith.constant 0 : index
    %c0_6 = arith.constant 0 : index
    %8 = vector.load %arg4[%c0_5, %c0_6] : memref<128x128xbf16, #tpu.memory_space<vmem>>, vector<128x128xbf16>
    %cst_7 = arith.constant dense<0.000000e+00> : vector<8x128xf32>
    %9 = tpu.matmul %7, %8, %cst_7 {dimension_numbers = #tpu.dot_dimension_numbers<[1], [0], [0], [1], [0, 0, 1, 1], [], []>} : vector<8x128xbf16>, vector<128x128xbf16>, vector<8x128xf32> -> vector<8x128xf32>
    %c0_8 = arith.constant 0 : index
    %c0_9 = arith.constant 0 : index
    %10 = vector.load %arg5[%c0_8, %c0_9] : memref<1x128xf32, #tpu.memory_space<vmem>>, vector<1x128xf32>
    %11 = vector.broadcast %10 : vector<1x128xf32> to vector<8x128xf32>
    %12 = arith.addf %9, %11 : vector<8x128xf32>
    %13 = math.tanh %12 : vector<8x128xf32>
    %14 = arith.truncf %13 : vector<8x128xf32> to vector<8x128xbf16>
    %c0_10 = arith.constant 0 : index
    %c0_11 = arith.constant 0 : index
    %15 = vector.load %arg6[%c0_10, %c0_11] : memref<128x128xbf16, #tpu.memory_space<vmem>>, vector<128x128xbf16>
    %cst_12 = arith.constant dense<0.000000e+00> : vector<8x128xf32>
    %16 = tpu.matmul %14, %15, %cst_12 {dimension_numbers = #tpu.dot_dimension_numbers<[1], [0], [0], [1], [0, 0, 1, 1], [], []>} : vector<8x128xbf16>, vector<128x128xbf16>, vector<8x128xf32> -> vector<8x128xf32>
    %c0_13 = arith.constant 0 : index
    %c0_14 = arith.constant 0 : index
    %17 = vector.load %arg7[%c0_13, %c0_14] : memref<1x128xf32, #tpu.memory_space<vmem>>, vector<1x128xf32>
    %18 = vector.broadcast %17 : vector<1x128xf32> to vector<8x128xf32>
    %19 = arith.addf %16, %18 : vector<8x128xf32>
    %20 = arith.negf %19 : vector<8x128xf32>
    %21 = math.exp %20 : vector<8x128xf32>
    %cst_15 = arith.constant 1.000000e+00 : f32
    %22 = vector.broadcast %cst_15 : f32 to vector<8x128xf32>
    %23 = arith.addf %22, %21 : vector<8x128xf32>
    %24 = arith.divf %22, %23 : vector<8x128xf32>
    %c0_16 = arith.constant 0 : index
    %c0_17 = arith.constant 0 : index
    %25 = vector.load %arg8[%c0_16, %c0_17] : memref<8x128xf32, #tpu.memory_space<vmem>>, vector<8x128xf32>
    tpu.vector_store %arg8[%c0_16, %c0_17], %24 {strides = array<i32>} : memref<8x128xf32, #tpu.memory_space<vmem>>, vector<8x128xf32>,
    return
  }
  func.func @transform_0(%arg0: i32) -> (i32, i32) {
    %c0_i32 = arith.constant 0 : i32
    %c0_i32_0 = arith.constant 0 : i32
    return %arg0, %c0_i32 : i32, i32
  }
  func.func @transform_1(%arg0: i32) -> (i32, i32) {
    %c0_i32 = arith.constant 0 : i32
    %c0_i32_0 = arith.constant 0 : i32
    %c0_i32_1 = arith.constant 0 : i32
    return %c0_i32, %c0_i32_0 : i32, i32
  }
  func.func @transform_2(%arg0: i32) -> (i32, i32) {
    %c0_i32 = arith.constant 0 : i32
    %c0_i32_0 = arith.constant 0 : i32
    %c0_i32_1 = arith.constant 0 : i32
    return %c0_i32, %c0_i32_0 : i32, i32
  }
  func.func @transform_3(%arg0: i32) -> (i32, i32) {
    %c0_i32 = arith.constant 0 : i32
    %c0_i32_0 = arith.constant 0 : i32
    %c0_i32_1 = arith.constant 0 : i32
    return %c0_i32, %c0_i32_0 : i32, i32
  }
  func.func @transform_4(%arg0: i32) -> (i32, i32) {
    %c0_i32 = arith.constant 0 : i32
    %c0_i32_0 = arith.constant 0 : i32
    %c0_i32_1 = arith.constant 0 : i32
    return %c0_i32, %c0_i32_0 : i32, i32
  }
  func.func @transform_5(%arg0: i32) -> (i32, i32) {
    %c0_i32 = arith.constant 0 : i32
    %c0_i32_0 = arith.constant 0 : i32
    %c0_i32_1 = arith.constant 0 : i32
    return %c0_i32, %c0_i32_0 : i32, i32
  }
  func.func @transform_6(%arg0: i32) -> (i32, i32) {
    %c0_i32 = arith.constant 0 : i32
    %c0_i32_0 = arith.constant 0 : i32
    %c0_i32_1 = arith.constant 0 : i32
    return %c0_i32, %c0_i32_0 : i32, i32
  }
  func.func @transform_7(%arg0: i32) -> (i32, i32) {
    %c0_i32 = arith.constant 0 : i32
    %c0_i32_0 = arith.constant 0 : i32
    return %arg0, %c0_i32 : i32, i32
  }
}

</mosaic_0001>

<llo_original>
// kernel: tpu_custom_call.1
$region0: #{tpu_custom_call.1}
  #allocation0 [shape = 'u32[]', space=smem, size = 0x4, offset = 0x4, fixed_abs, tag = 'smem constant byte address 0x4 - core index']
  #allocation1 [shape = 'u32[144,128]{1,0:T(1,128)}', space=vmem, size = 0x12000, scoped, tag = 'internal scratch']
  %s0 = inlined_call_operand.vmem [shape: bf16[8,4], index: 0, kind: input, shape index: {}]
  %s1 = inlined_call_operand.vmem [shape: bf16[4,128], index: 1, kind: input, shape index: {}]
  %s2 = inlined_call_operand.vmem [shape: f32[1,128], index: 2, kind: input, shape index: {}]
  %s3 = inlined_call_operand.hbm [shape: bf16[128,128], index: 3, kind: input, shape index: {}]
  %s4 = inlined_call_operand.vmem [shape: f32[1,128], index: 4, kind: input, shape index: {}]
  %s5 = inlined_call_operand.hbm [shape: bf16[128,128], index: 5, kind: input, shape index: {}]
  %s6 = inlined_call_operand.vmem [shape: f32[1,128], index: 6, kind: input, shape index: {}]
  %s7 = inlined_call_operand.hbm [shape: f32[8,128], index: 7, kind: output, shape index: {}]
  %s8 = sld [smem:[#allocation0]]
  $region46: #{tpu_custom_call.1} parent=0
    _
  %s10 = ssub.s32 1, %s8
  %s11 = scalar_select 0, %s10, %s8
  $region1: #{tpu_custom_call.1} parent=0
    #allocation2 [shape = 'u8[32768]{0}', space=vmem, size = 0x8000, scoped, tag = 'input window, operand 3, single buffered']
    #allocation3 [shape = 's32[1]{0}', space=sflag, size = 0x4, scoped, tag = 'scoped memory for tpu_custom_call.1']
    #allocation4 [shape = 's32[1]{0}', space=sflag, size = 0x4, scoped, tag = 'scoped memory for tpu_custom_call.1']
    #allocation5 [shape = 'u8[32768]{0}', space=vmem, size = 0x8000, scoped, tag = 'input window, operand 5, single buffered']
    #allocation6 [shape = 's32[1]{0}', space=sflag, size = 0x4, scoped, tag = 'scoped memory for tpu_custom_call.1']
    #allocation7 [shape = 'u8[4096]{0}', space=vmem, size = 0x1000, scoped, tag = 'output window, operand 0, single buffered']
    %12 = vsyncpa [#allocation3], 0
    %13 = vsyncpa [#allocation6], 0
    %14 = vsyncpa [#allocation4], 0
    // Predicated region
    $region2: #{tpu_custom_call.1} parent=1 // pred_check
      _
    $region3: #{tpu_custom_call.1} parent=1 // pred_check_branch
      %16 = sbr.rel (0) target = $region5
    $region4: #{tpu_custom_call.1} parent=1 // pred_region
      _
    $region5: #{tpu_custom_call.1} parent=1 // pred_fallthru
      _
    // Predicated region
    $region6: #{tpu_custom_call.1} parent=1 // pred_check
      _
    $region7: #{tpu_custom_call.1} parent=1 // pred_check_branch
      %18 = sbr.rel (0) target = $region9
    $region8: #{tpu_custom_call.1} parent=1 // pred_region
      _
    $region9: #{tpu_custom_call.1} parent=1 // pred_fallthru
      _
    // Predicated region
    $region10: #{tpu_custom_call.1} parent=1 // pred_check
      _
    $region11: #{tpu_custom_call.1} parent=1 // pred_check_branch
      %20 = sbr.rel (0) target = $region13
    $region12: #{tpu_custom_call.1} parent=1 // pred_region
      _
    $region13: #{tpu_custom_call.1} parent=1 // pred_fallthru
      _
    // Predicated region
    $region14: #{tpu_custom_call.1} parent=1 // pred_check
      _
    $region15: #{tpu_custom_call.1} parent=1 // pred_check_branch
      %22 = sbr.rel (0) target = $region17
    $region16: #{tpu_custom_call.1} parent=1 // pred_region
      %s24 = ssub.s32 1024, 1024
      %25 = vsyncadd [#allocation3], %s24
      %s26 = sshll.u32 [#allocation2], 4
      %s27 = int_to_ptr.vmem [resolvable:$true] %s26
      %32 = dma.hbm_to_vmem [thread:$0]  %s3, 1024, %s27, [#allocation3], 64, 64, 4
    $region17: #{tpu_custom_call.1} parent=1 // pred_fallthru
      _
    // Predicated region
    $region18: #{tpu_custom_call.1} parent=1 // pred_check
      _
    $region19: #{tpu_custom_call.1} parent=1 // pred_check_branch
      %34 = sbr.rel (0) target = $region21
    $region20: #{tpu_custom_call.1} parent=1 // pred_region
      _
    $region21: #{tpu_custom_call.1} parent=1 // pred_fallthru
      _
    // Predicated region
    $region22: #{tpu_custom_call.1} parent=1 // pred_check
      _
    $region23: #{tpu_custom_call.1} parent=1 // pred_check_branch
      %36 = sbr.rel (0) target = $region25
    $region24: #{tpu_custom_call.1} parent=1 // pred_region
      %s38 = ssub.s32 1024, 1024
      %39 = vsyncadd [#allocation6], %s38
      %s40 = sshll.u32 [#allocation5], 4
      %s41 = int_to_ptr.vmem [resolvable:$true] %s40
      %46 = dma.hbm_to_vmem [thread:$0]  %s5, 1024, %s41, [#allocation6], 64, 64, 4
    $region25: #{tpu_custom_call.1} parent=1 // pred_fallthru
      _
    // Predicated region
    $region26: #{tpu_custom_call.1} parent=1 // pred_check
      _
    $region27: #{tpu_custom_call.1} parent=1 // pred_check_branch
      %48 = sbr.rel (0) target = $region29
    $region28: #{tpu_custom_call.1} parent=1 // pred_region
      _
    $region29: #{tpu_custom_call.1} parent=1 // pred_fallthru
      _
    // Predicated region
    $region30: #{tpu_custom_call.1} parent=1 // pred_check
      _
    $region31: #{tpu_custom_call.1} parent=1 // pred_check_branch
      %50 = sbr.rel (0) target = $region33
    $region32: #{tpu_custom_call.1} parent=1 // pred_region
      %51 = dma.done [#allocation3], 1024
    $region33: #{tpu_custom_call.1} parent=1 // pred_fallthru
      _
    // Predicated region
    $region34: #{tpu_custom_call.1} parent=1 // pred_check
      _
    $region35: #{tpu_custom_call.1} parent=1 // pred_check_branch
      %53 = sbr.rel (0) target = $region37
    $region36: #{tpu_custom_call.1} parent=1 // pred_region
      %54 = dma.done [#allocation6], 1024
    $region37: #{tpu_custom_call.1} parent=1 // pred_fallthru
      _
    %v56 = vld [vmem:[%s0] sm:$0xf]
    %v57 = vld [vmem:[%s1] sm:$0x3]
    %v58 = vld [vmem:[%s2] sm:$0x1]
    %v60 = vlaneseq
    %v61 = vshrl.u32 %v60, 7
    %v62 = vsub.s32 0, %v61
    %v63 = vrot.slane %v58, %v62
    %vm65 = vcmask 31744
    %v67 = vsel %vm65, %v56, 0
    %vm69 = vcmask 1041408
    %v71 = vsel %vm69, %v57, 0
    %73 = vmatprep.subr.bf16.mxu0 0
    %74 = vmatpush1.bf16.msra.mxu0 %v71
    %75 = vmatprep.subr.bf16.mxu0 0
    %76 = vmatpush1.bf16.msra.mxu0 0
    %77 = vmatprep.subr.bf16.mxu0 0
    %78 = vmatpush1.bf16.msra.mxu0 0
    %79 = vmatprep.subr.bf16.mxu0 0
    %80 = vmatpush1.bf16.msra.mxu0 0
    %81 = vmatprep.subr.bf16.mxu0 0
    %82 = vmatpush1.bf16.msra.mxu0 0
    %83 = vmatprep.subr.bf16.mxu0 0
    %84 = vmatpush1.bf16.msra.mxu0 0
    %85 = vmatprep.subr.bf16.mxu0 0
    %86 = vmatpush1.bf16.msra.mxu0 0
    %87 = vmatprep.subr.bf16.mxu0 0
    %88 = vmatpush1.bf16.msra.mxu0 0
    %89 = vmatprep.subr.bf16.mxu0 0
    %90 = vmatpush1.bf16.msra.mxu0 0
    %91 = vmatprep.subr.bf16.mxu0 0
    %92 = vmatpush1.bf16.msra.mxu0 0
    %93 = vmatprep.subr.bf16.mxu0 0
    %94 = vmatpush1.bf16.msra.mxu0 0
    %95 = vmatprep.subr.bf16.mxu0 0
    %96 = vmatpush1.bf16.msra.mxu0 0
    %97 = vmatprep.subr.bf16.mxu0 0
    %98 = vmatpush1.bf16.msra.mxu0 0
    %99 = vmatprep.subr.bf16.mxu0 0
    %100 = vmatpush1.bf16.msra.mxu0 0
    %101 = vmatprep.subr.bf16.mxu0 0
    %102 = vmatpush1.bf16.msra.mxu0 0
    %103 = vmatprep.subr.bf16.mxu0 0
    %104 = vmatpush1.bf16.msra.mxu0 0
    %105 = vmatprep.mubr.bf16.mxu0 0
    %106 = vmatmul.mubr.bf16.gmra.mrb[0].mxu0 %v67
    %v107 = vpop.f32.mrb[0].mxu0
    %v108 = vadd.f32 %v63, %v107
    %v109 = vpop.f32.mrb[0].mxu0
    %v110 = vpop.f32.mrb[0].mxu0
    %v111 = vpop.f32.mrb[0].mxu0
    %112 = vdwg.mxu0
    %v113 = vtanh.pop %v108
    %v114 = vpack.c.bf16 %v113, %v113
    %v115 = vld [vmem:[#allocation2] sm:$0xf]
    %v116 = vld [vmem:[#allocation2 + $0x4] sm:$0xf]
    %v117 = vld [vmem:[#allocation2 + $0x8] sm:$0xf]
    %v118 = vld [vmem:[#allocation2 + $0xc] sm:$0xf]
    %v119 = vld [vmem:[#allocation2 + $0x10] sm:$0xf]
    %v120 = vld [vmem:[#allocation2 + $0x14] sm:$0xf]
    %v121 = vld [vmem:[#allocation2 + $0x18] sm:$0xf]
    %v122 = vld [vmem:[#allocation2 + $0x1c] sm:$0xf]
    %v123 = vld [vmem:[#allocation2 + $0x20] sm:$0xf]
    %v124 = vld [vmem:[#allocation2 + $0x24] sm:$0xf]
    %v125 = vld [vmem:[#allocation2 + $0x28] sm:$0xf]
    %v126 = vld [vmem:[#allocation2 + $0x2c] sm:$0xf]
    %v127 = vld [vmem:[#allocation2 + $0x30] sm:$0xf]
    %v128 = vld [vmem:[#allocation2 + $0x34] sm:$0xf]
    %v129 = vld [vmem:[#allocation2 + $0x38] sm:$0xf]
    %v130 = vld [vmem:[#allocation2 + $0x3c] sm:$0xf]
    %v131 = vld [vmem:[%s4] sm:$0x1]
    %v133 = vlaneseq
    %v134 = vshrl.u32 %v133, 7
    %v135 = vsub.s32 0, %v134
    %v136 = vrot.slane %v131, %v135
    %v154 = vunpack.c.l.b16 %v115
    %v155 = vunpack.c.l.b16 %v116
    %v156 = vunpack.c.l.b16 %v117
    %v157 = vunpack.c.l.b16 %v118
    %v158 = vunpack.c.l.b16 %v119
    %v159 = vunpack.c.l.b16 %v120
    %v160 = vunpack.c.l.b16 %v121
    %v161 = vunpack.c.l.b16 %v122
    %v162 = vunpack.c.l.b16 %v123
    %v163 = vunpack.c.l.b16 %v124
    %v164 = vunpack.c.l.b16 %v125
    %v165 = vunpack.c.l.b16 %v126
    %v166 = vunpack.c.l.b16 %v127
    %v167 = vunpack.c.l.b16 %v128
    %v168 = vunpack.c.l.b16 %v129
    %v169 = vunpack.c.l.b16 %v130
    %v170 = vpack.c.b16 %v155, %v154
    %v171 = vpack.c.b16 %v157, %v156
    %v172 = vpack.c.b16 %v159, %v158
    %v173 = vpack.c.b16 %v161, %v160
    %v174 = vpack.c.b16 %v163, %v162
    %v175 = vpack.c.b16 %v165, %v164
    %v176 = vpack.c.b16 %v167, %v166
    %v177 = vpack.c.b16 %v169, %v168
    %186 = vmatprep.subr.bf16.mxu0 0
    %187 = vmatpush1.bf16.msra.mxu0 %v170
    %188 = vmatprep.subr.bf16.mxu0 0
    %189 = vmatpush1.bf16.msra.mxu0 %v171
    %190 = vmatprep.subr.bf16.mxu0 0
    %191 = vmatpush1.bf16.msra.mxu0 %v172
    %192 = vmatprep.subr.bf16.mxu0 0
    %193 = vmatpush1.bf16.msra.mxu0 %v173
    %194 = vmatprep.subr.bf16.mxu0 0
    %195 = vmatpush1.bf16.msra.mxu0 %v174
    %196 = vmatprep.subr.bf16.mxu0 0
    %197 = vmatpush1.bf16.msra.mxu0 %v175
    %198 = vmatprep.subr.bf16.mxu0 0
    %199 = vmatpush1.bf16.msra.mxu0 %v176
    %200 = vmatprep.subr.bf16.mxu0 0
    %201 = vmatpush1.bf16.msra.mxu0 %v177
    %202 = vmatprep.subr.bf16.mxu0 0
    %203 = vmatpush1.bf16.msra.mxu0 0
    %204 = vmatprep.subr.bf16.mxu0 0
    %205 = vmatpush1.bf16.msra.mxu0 0
    %206 = vmatprep.subr.bf16.mxu0 0
    %207 = vmatpush1.bf16.msra.mxu0 0
    %208 = vmatprep.subr.bf16.mxu0 0
    %209 = vmatpush1.bf16.msra.mxu0 0
    %210 = vmatprep.subr.bf16.mxu0 0
    %211 = vmatpush1.bf16.msra.mxu0 0
    %212 = vmatprep.subr.bf16.mxu0 0
    %213 = vmatpush1.bf16.msra.mxu0 0
    %214 = vmatprep.subr.bf16.mxu0 0
    %215 = vmatpush1.bf16.msra.mxu0 0
    %216 = vmatprep.subr.bf16.mxu0 0
    %217 = vmatpush1.bf16.msra.mxu0 0
    %218 = vmatprep.mubr.bf16.mxu0 0
    %219 = vmatmul.mubr.bf16.gmra.mrb[0].mxu0 %v114
    %v220 = vpop.f32.mrb[0].mxu0
    %v221 = vadd.f32 %v136, %v220
    %v222 = vpop.f32.mrb[0].mxu0
    %v223 = vpop.f32.mrb[0].mxu0
    %v224 = vpop.f32.mrb[0].mxu0
    %225 = vdwg.mxu0
    %v226 = vtanh.pop %v221
    %v227 = vpack.c.bf16 %v226, %v226
    %v228 = vld [vmem:[#allocation5] sm:$0xf]
    %v229 = vld [vmem:[#allocation5 + $0x4] sm:$0xf]
    %v230 = vld [vmem:[#allocation5 + $0x8] sm:$0xf]
    %v231 = vld [vmem:[#allocation5 + $0xc] sm:$0xf]
    %v232 = vld [vmem:[#allocation5 + $0x10] sm:$0xf]
    %v233 = vld [vmem:[#allocation5 + $0x14] sm:$0xf]
    %v234 = vld [vmem:[#allocation5 + $0x18] sm:$0xf]
    %v235 = vld [vmem:[#allocation5 + $0x1c] sm:$0xf]
    %v236 = vld [vmem:[#allocation5 + $0x20] sm:$0xf]
    %v237 = vld [vmem:[#allocation5 + $0x24] sm:$0xf]
    %v238 = vld [vmem:[#allocation5 + $0x28] sm:$0xf]
    %v239 = vld [vmem:[#allocation5 + $0x2c] sm:$0xf]
    %v240 = vld [vmem:[#allocation5 + $0x30] sm:$0xf]
    %v241 = vld [vmem:[#allocation5 + $0x34] sm:$0xf]
    %v242 = vld [vmem:[#allocation5 + $0x38] sm:$0xf]
    %v243 = vld [vmem:[#allocation5 + $0x3c] sm:$0xf]
    %v244 = vld [vmem:[%s6] sm:$0x1]
    %v246 = vlaneseq
    %v247 = vshrl.u32 %v246, 7
    %v248 = vsub.s32 0, %v247
    %v249 = vrot.slane %v244, %v248
    %v267 = vunpack.c.l.b16 %v228
    %v268 = vunpack.c.l.b16 %v229
    %v269 = vunpack.c.l.b16 %v230
    %v270 = vunpack.c.l.b16 %v231
    %v271 = vunpack.c.l.b16 %v232
    %v272 = vunpack.c.l.b16 %v233
    %v273 = vunpack.c.l.b16 %v234
    %v274 = vunpack.c.l.b16 %v235
    %v275 = vunpack.c.l.b16 %v236
    %v276 = vunpack.c.l.b16 %v237
    %v277 = vunpack.c.l.b16 %v238
    %v278 = vunpack.c.l.b16 %v239
    %v279 = vunpack.c.l.b16 %v240
    %v280 = vunpack.c.l.b16 %v241
    %v281 = vunpack.c.l.b16 %v242
    %v282 = vunpack.c.l.b16 %v243
    %v283 = vpack.c.b16 %v268, %v267
    %v284 = vpack.c.b16 %v270, %v269
    %v285 = vpack.c.b16 %v272, %v271
    %v286 = vpack.c.b16 %v274, %v273
    %v287 = vpack.c.b16 %v276, %v275
    %v288 = vpack.c.b16 %v278, %v277
    %v289 = vpack.c.b16 %v280, %v279
    %v290 = vpack.c.b16 %v282, %v281
    %299 = vmatprep.subr.bf16.mxu0 0
    %300 = vmatpush1.bf16.msra.mxu0 %v283
    %301 = vmatprep.subr.bf16.mxu0 0
    %302 = vmatpush1.bf16.msra.mxu0 %v284
    %303 = vmatprep.subr.bf16.mxu0 0
    %304 = vmatpush1.bf16.msra.mxu0 %v285
    %305 = vmatprep.subr.bf16.mxu0 0
    %306 = vmatpush1.bf16.msra.mxu0 %v286
    %307 = vmatprep.subr.bf16.mxu0 0
    %308 = vmatpush1.bf16.msra.mxu0 %v287
    %309 = vmatprep.subr.bf16.mxu0 0
    %310 = vmatpush1.bf16.msra.mxu0 %v288
    %311 = vmatprep.subr.bf16.mxu0 0
    %312 = vmatpush1.bf16.msra.mxu0 %v289
    %313 = vmatprep.subr.bf16.mxu0 0
    %314 = vmatpush1.bf16.msra.mxu0 %v290
    %315 = vmatprep.subr.bf16.mxu0 0
    %316 = vmatpush1.bf16.msra.mxu0 0
    %317 = vmatprep.subr.bf16.mxu0 0
    %318 = vmatpush1.bf16.msra.mxu0 0
    %319 = vmatprep.subr.bf16.mxu0 0
    %320 = vmatpush1.bf16.msra.mxu0 0
    %321 = vmatprep.subr.bf16.mxu0 0
    %322 = vmatpush1.bf16.msra.mxu0 0
    %323 = vmatprep.subr.bf16.mxu0 0
    %324 = vmatpush1.bf16.msra.mxu0 0
    %325 = vmatprep.subr.bf16.mxu0 0
    %326 = vmatpush1.bf16.msra.mxu0 0
    %327 = vmatprep.subr.bf16.mxu0 0
    %328 = vmatpush1.bf16.msra.mxu0 0
    %329 = vmatprep.subr.bf16.mxu0 0
    %330 = vmatpush1.bf16.msra.mxu0 0
    %331 = vmatprep.mubr.bf16.mxu0 0
    %332 = vmatmul.mubr.bf16.gmra.mrb[0].mxu0 %v227
    %v333 = vpop.f32.mrb[0].mxu0
    %v334 = vadd.f32 %v249, %v333
    %v335 = vpop.f32.mrb[0].mxu0
    %v336 = vpop.f32.mrb[0].mxu0
    %v337 = vpop.f32.mrb[0].mxu0
    %338 = vdwg.mxu0
    %v339 = vxor.u32 %v334, 2147483648
    %v340 = vmul.f32 %v339, 1.442695
    %v341 = vpow.pop %v340
    %v342 = vadd.f32 %v341, 1.0
    %v343 = vrcp.pop %v342
    %v344 = vmul.f32 1.0, %v343
    %345 = vst [vmem:[#allocation7] sm:$0xff] %v344
    // Predicated region
    $region38: #{tpu_custom_call.1} parent=1 // pred_check
      _
    $region39: #{tpu_custom_call.1} parent=1 // pred_check_branch
      %347 = sbr.rel (0) target = $region41
    $region40: #{tpu_custom_call.1} parent=1 // pred_region
      %s349 = ssub.s32 128, 128
      %350 = vsyncadd [#allocation4], %s349
      %s352 = sshll.u32 [#allocation7], 4
      %s353 = int_to_ptr.vmem [resolvable:$true] %s352
      %355 = dma.vmem_to_hbm [thread:$0]  %s353, 128, %s7, [#allocation4]
    $region41: #{tpu_custom_call.1} parent=1 // pred_fallthru
      _
    // Predicated region
    $region42: #{tpu_custom_call.1} parent=1 // pred_check
      _
    $region43: #{tpu_custom_call.1} parent=1 // pred_check_branch
      %357 = sbr.rel (0) target = $region45
    $region44: #{tpu_custom_call.1} parent=1 // pred_region
      %358 = dma.done [#allocation4], 128
    $region45: #{tpu_custom_call.1} parent=1 // pred_fallthru
      _
    %359 = vsyncpa [#allocation3], 1
    %360 = vsyncpa [#allocation6], 1
    %361 = vsyncpa [#allocation4], 1

</llo_original>
